<compile_context>
chip_gen: v7x
topology: tpu7x:2x2x1
jax: 0.10.0
libtpu: 0.0.40
codegen_flags: <defaults>
</compile_context>

<pallas_src>
import jax
import jax.numpy as jnp
from jax.experimental import pallas as pl
from jax.experimental.pallas import tpu as pltpu

_LANES = 128


# ----------------------------- Pallas kernels ------------------------------ #

def _make_pool_kernel(hw, t_hw, sub, n_j, needs_mask):
    """Global sum-pool over HW, lane-wide accumulation.

    Per step: VPU adds of 128-lane slabs into a (C, sub) f32 scratch.  The
    single cross-lane reduce + (C, 1) store happens only at the last step of
    the reduction axis.
    """
    n_sub = t_hw // sub

    def pool_kernel(x_ref, psum_ref, acc_ref):
        # x_ref   : (1, C, t_hw)   input tile (HW on lanes)
        # psum_ref: (1, 1, C, 1)   f32 partial sum for this (batch, split)
        # acc_ref : (C, sub)       f32 lane-wide accumulator scratch
        j = pl.program_id(2)

        @pl.when(j == 0)
        def _():
            acc_ref[...] = jnp.zeros_like(acc_ref)

        base = (pl.program_id(1) * n_j + j) * t_hw      # global HW offset
        part = acc_ref[...]
        for s in range(n_sub):                          # short static loop
            xs = x_ref[0, :, s * sub:(s + 1) * sub].astype(jnp.float32)
            if needs_mask:
                lane = jax.lax.broadcasted_iota(jnp.int32, (1, sub), 1)
                xs = jnp.where(base + s * sub + lane < hw, xs, 0.0)
            part = part + xs                            # VPU adds, lane-wide
        acc_ref[...] = part

        @pl.when(j == n_j - 1)
        def _():
            # single cross-lane (XLU) reduce per (batch, split)
            psum_ref[0, 0] = jnp.sum(acc_ref[...], axis=1, keepdims=True)

    return pool_kernel


def gemm_kernel(attn_ref, w1_ref, b1_ref, x_ref, o_ref):
    # attn_ref : (1, 1, C)      per-batch channel attention, lane-major
    # w1_ref   : (C2, C)        1x1 conv weight (resident)
    # b1_ref   : (C2, 1)        1x1 conv bias (f32)
    # x_ref    : (1, C, tHW)    input tile
    # o_ref    : (1, C2, tHW)   output tile (lane-dense over HW)
    # Fold attention into the weight: (W1 * attn) @ x == W1 @ (x * attn),
    # removing the (C, tHW) scaled-x temporary entirely.
    ws = w1_ref[...] * attn_ref[0]                                  # (C2, C)
    acc = jnp.dot(ws, x_ref[0], preferred_element_type=jnp.float32)  # MXU
    o_ref[0] = (acc + b1_ref[...]).astype(o_ref.dtype)


# ------------------------------- wrapper ----------------------------------- #

def _vmem_limits():
    """Generation-aware (budget, scoped-limit) in bytes."""
    try:
        info = pltpu.get_tpu_info()
        cap = int(getattr(info, "vmem_capacity_bytes", 0)) or 128 * 1024 * 1024
    except Exception:
        cap = 128 * 1024 * 1024
    limit = min(cap // 2, 64 * 1024 * 1024)        # requested scoped VMEM
    budget = min(limit // 2, 24 * 1024 * 1024)     # tile-picker budget
    return budget, limit


def _pick_spatial_tile(hw, c, c2, itemsize, budget_bytes, max_lanes=1024):
    """Largest lane (HW) tile whose full footprint fits the budget.

    Footprint counts double-buffered x/out tiles, the resident W1 block
    (still 2 buffers), the f32 matmul accumulator, the pool's lane-wide
    scratch, and the small attn/bias blocks.  Tiles are multiples of 128
    (cdiv grid + tail masking) or the full HW extent.
    """
    def footprint(t):
        return (2 * c * t * itemsize            # x tile, double buffered
                + 2 * c2 * t * itemsize         # out tile, double buffered
                + 2 * c2 * c * itemsize         # resident W1 block (2 bufs)
                + c2 * t * 4                    # f32 matmul accumulator
                + c * _LANES * 4                # pool lane-wide scratch
                + 2 * (c * itemsize + c2 * 4))  # attn + bias blocks

    if hw < _LANES:
        return hw                               # only legal block: full dim
    if hw <= max_lanes and footprint(hw) <= budget_bytes:
        return hw                               # single full-extent tile
    best = _LANES
    t = _LANES
    while t <= min(hw, max_lanes):
        if footprint(t) <= budget_bytes:
            best = t
        t += _LANES
    # TODO(synk): add a C2 / C grid axis (tiled weight slabs) for very large
    # channel counts where even a 128-lane tile with the full W1 overflows.
    return best


def eca_forward(x_nchw, wc, w1, b1):
    """x_nchw: (B, C, H, W); wc: (C, k); w1: (C//2, C); b1: (C//2,)."""
    B, C, H, W = x_nchw.shape
    HW = H * W
    C2 = w1.shape[0]
    k = wc.shape[1]
    pad = (k - 1) // 2
    dtype = x_nchw.dtype
    itemsize = jnp.dtype(dtype).itemsize

    budget, vmem_limit = _vmem_limits()
    x3 = x_nchw.reshape(B, C, HW)               # free: NCHW -> (B, C, HW)

    tHW = _pick_spatial_tile(HW, C, C2, itemsize, budget)
    nHW = pl.cdiv(HW, tHW)
    needs_mask = (HW % tHW) != 0

    # Split the HW reduction into 2 parallel chunks when it divides evenly so
    # the pool pass shards across both TensorCores on v7x even at batch 1.
    nsplit = 2 if (nHW >= 2 and nHW % 2 == 0) else 1
    nJ = nHW // nsplit
    sub = _LANES if (tHW % _LANES == 0) else tHW

    # ---- Pallas kernel 1: global average pool (sum over HW) ----------------
    pooled_parts = pl.pallas_call(
        _make_pool_kernel(HW, tHW, sub, nJ, needs_mask),
        out_shape=jax.ShapeDtypeStruct((B, nsplit, C, 1), jnp.float32),
        grid_spec=pltpu.PrefetchScalarGridSpec(
            num_scalar_prefetch=0,
            grid=(B, nsplit, nJ),
            in_specs=[pl.BlockSpec((1, C, tHW),
                                   lambda b, s, j: (b, 0, s * nJ + j))],
            out_specs=pl.BlockSpec((1, 1, C, 1),
                                   lambda b, s, j: (b, s, 0, 0)),
            scratch_shapes=[pltpu.VMEM((C, sub), jnp.float32)],
        ),
        compiler_params=pltpu.CompilerParams(
            dimension_semantics=("parallel", "parallel", "arbitrary"),
            vmem_limit_bytes=vmem_limit),
    )(x3)
    pooled = jnp.sum(pooled_parts, axis=1)[:, :, 0] / float(HW)     # (B, C) f32

    # ---- tiny ECA per-channel conv + sigmoid: O(B*C*k), plain JAX ----------
    pooled_pad = jnp.pad(pooled, ((0, 0), (pad, k - 1 - pad)))
    logits = jnp.zeros((B, C), jnp.float32)
    for t in range(k):                                              # k is tiny
        logits = logits + wc[None, :, t].astype(jnp.float32) * pooled_pad[:, t:t + C]
    attn = jax.nn.sigmoid(logits)                                   # (B, C) f32
    attn3 = attn.astype(dtype).reshape(B, 1, C)                     # lane-major

    # ---- Pallas kernel 2: 1x1 conv GEMM with attention folded into W1 ------
    w1m = w1.astype(dtype)                                          # (C2, C)
    b1m = b1.astype(jnp.float32).reshape(C2, 1)                     # (C2, 1)

    out3 = pl.pallas_call(
        gemm_kernel,
        out_shape=jax.ShapeDtypeStruct((B, C2, HW), dtype),
        grid_spec=pltpu.PrefetchScalarGridSpec(
            num_scalar_prefetch=0,
            grid=(B, nHW),
            in_specs=[
                pl.BlockSpec((1, 1, C), lambda b, j: (b, 0, 0)),     # attn
                pl.BlockSpec((C2, C), lambda b, j: (0, 0)),          # W1
                pl.BlockSpec((C2, 1), lambda b, j: (0, 0)),          # bias
                pl.BlockSpec((1, C, tHW), lambda b, j: (b, 0, j)),   # x tile
            ],
            out_specs=pl.BlockSpec((1, C2, tHW), lambda b, j: (b, 0, j)),
        ),
        compiler_params=pltpu.CompilerParams(
            dimension_semantics=("parallel", "parallel"),
            vmem_limit_bytes=vmem_limit),
    )(attn3, w1m, b1m, x3)

    # TODO(synk): fused single-pass variant (pool + ECA conv + GEMM in one
    # pallas_call) for small-HW / large-C layers to read x from HBM only once.
    return out3.reshape(B, C2, H, W)


# ------------------------------ reference ----------------------------------- #

def eca_reference(x, wc, w1, b1):
    """Pure-JAX reference mirroring the PyTorch forward (NCHW)."""
    B, C, H, W = x.shape
    k = wc.shape[1]
    pad = (k - 1) // 2
    pooled = jnp.mean(x, axis=(2, 3))                               # (B, C)
    pooled_pad = jnp.pad(pooled, ((0, 0), (pad, k - 1 - pad)))
    logits = jnp.zeros((B, C), jnp.float32)
    for t in range(k):
        logits = logits + wc[None, :, t] * pooled_pad[:, t:t + C]
    attn = jax.nn.sigmoid(logits)                                   # (B, C)
    xs = x * attn[:, :, None, None]
    out = jnp.einsum('oc,bchw->bohw', w1, xs) + b1[None, :, None, None]
    return out


if __name__ == "__main__":
    B, C, H, W = 2, 4, 16, 16
    K = 3  # k_size (odd, as in the PyTorch module's padding scheme)

    key = jax.random.PRNGKey(0)
    kx, kwc, kw1, kb1 = jax.random.split(key, 4)
    x = jax.random.normal(kx, (B, C, H, W), dtype=jnp.float32)
    # nn.Conv1d(C, C, K, groups=C, bias=False).weight: (C, 1, K) -> (C, K)
    wc = 0.1 * jax.random.normal(kwc, (C, K), dtype=jnp.float32)
    # nn.Conv2d(C, C//2, 1).weight: (C//2, C, 1, 1) -> (C//2, C), bias (C//2,)
    w1 = 0.1 * jax.random.normal(kw1, (C // 2, C), dtype=jnp.float32)
    b1 = 0.1 * jax.random.normal(kb1, (C // 2,), dtype=jnp.float32)

    fwd = jax.jit(eca_forward)
    out = jax.block_until_ready(fwd(x, wc, w1, b1))

    ref = eca_reference(x, wc, w1, b1)
    assert out.shape == (B, C // 2, H, W), out.shape
    assert jnp.allclose(out, ref, rtol=1e-4, atol=1e-5), float(
        jnp.max(jnp.abs(out - ref)))

    print("KERNEL_OK")
</pallas_src>

<mosaic_0001>
module attributes {stable_mosaic.version = 11 : i64} {
  func.func @pool_kernel(%arg0: i32, %arg1: i32, %arg2: i32, %arg3: memref<1x4x256xf32, #tpu.memory_space<vmem>>, %arg4: memref<1x1x4x1xf32, #tpu.memory_space<vmem>>, %arg5: memref<4x128xf32, #tpu.memory_space<vmem>>) attributes {dimension_semantics = [#tpu.dimension_semantics<parallel>, #tpu.dimension_semantics<parallel>, #tpu.dimension_semantics<arbitrary>], iteration_bounds = array<i64: 2, 1, 1>, scalar_prefetch = 0 : i64, scratch_operands = 1 : i64, tpu.core_type = #tpu.core_type<tc>, window_params = [{transform_indices = @transform_0, window_bounds = array<i64: 1, 4, 256>}, {transform_indices = @transform_1, window_bounds = array<i64: 1, 1, 4, 1>}]} {
    %c0_i32 = arith.constant 0 : i32
    %0 = arith.cmpi eq, %arg2, %c0_i32 : i32
    %1 = arith.extui %0 : i1 to i32
    %c0_i32_0 = arith.constant 0 : i32
    %2 = arith.cmpi ne, %1, %c0_i32_0 : i32
    scf.if %2 {
      %cst = arith.constant 0.000000e+00 : f32
      %14 = vector.broadcast %cst : f32 to vector<4x128xf32>
      %c0_11 = arith.constant 0 : index
      %c0_12 = arith.constant 0 : index
      %15 = vector.load %arg5[%c0_11, %c0_12] : memref<4x128xf32, #tpu.memory_space<vmem>>, vector<4x128xf32>
      tpu.vector_store %arg5[%c0_11, %c0_12], %14 {strides = array<i32>} : memref<4x128xf32, #tpu.memory_space<vmem>>, vector<4x128xf32>,
    } else {
    }
    %c0 = arith.constant 0 : index
    %c0_1 = arith.constant 0 : index
    %3 = vector.load %arg5[%c0, %c0_1] : memref<4x128xf32, #tpu.memory_space<vmem>>, vector<4x128xf32>
    %c0_2 = arith.constant 0 : index
    %c0_3 = arith.constant 0 : index
    %c0_4 = arith.constant 0 : index
    %4 = vector.load %arg3[%c0_2, %c0_3, %c0_4] : memref<1x4x256xf32, #tpu.memory_space<vmem>>, vector<1x4x128xf32>
    %5 = vector.shape_cast %4 : vector<1x4x128xf32> to vector<4x128xf32>
    %6 = arith.addf %3, %5 : vector<4x128xf32>
    %c0_5 = arith.constant 0 : index
    %c0_6 = arith.constant 0 : index
    %c128 = arith.constant 128 : index
    %7 = vector.load %arg3[%c0_5, %c0_6, %c128] : memref<1x4x256xf32, #tpu.memory_space<vmem>>, vector<1x4x128xf32>
    %8 = vector.shape_cast %7 : vector<1x4x128xf32> to vector<4x128xf32>
    %9 = arith.addf %6, %8 : vector<4x128xf32>
    %c0_7 = arith.constant 0 : index
    %c0_8 = arith.constant 0 : index
    %10 = vector.load %arg5[%c0_7, %c0_8] : memref<4x128xf32, #tpu.memory_space<vmem>>, vector<4x128xf32>
    tpu.vector_store %arg5[%c0_7, %c0_8], %9 {strides = array<i32>} : memref<4x128xf32, #tpu.memory_space<vmem>>, vector<4x128xf32>,
    %c0_i32_9 = arith.constant 0 : i32
    %11 = arith.cmpi eq, %arg2, %c0_i32_9 : i32
    %12 = arith.extui %11 : i1 to i32
    %c0_i32_10 = arith.constant 0 : i32
    %13 = arith.cmpi ne, %12, %c0_i32_10 : i32
    scf.if %13 {
      %c0_11 = arith.constant 0 : index
      %c0_12 = arith.constant 0 : index
      %14 = vector.load %arg5[%c0_11, %c0_12] : memref<4x128xf32, #tpu.memory_space<vmem>>, vector<4x128xf32>
      %cst = arith.constant dense<0.000000e+00> : vector<4xf32>
      %15 = vector.multi_reduction <add>, %14, %cst [1] : vector<4x128xf32> to vector<4xf32>
      %16 = vector.shape_cast %15 : vector<4xf32> to vector<4x1xf32>
      %c0_13 = arith.constant 0 : index
      %c0_14 = arith.constant 0 : index
      %c0_15 = arith.constant 0 : index
      %c0_16 = arith.constant 0 : index
      %17 = vector.load %arg4[%c0_13, %c0_14, %c0_15, %c0_16] : memref<1x1x4x1xf32, #tpu.memory_space<vmem>>, vector<1x1x4x1xf32>
      %18 = vector.shape_cast %17 : vector<1x1x4x1xf32> to vector<4x1xf32>
      %19 = vector.shape_cast %16 : vector<4x1xf32> to vector<1x1x4x1xf32>
      tpu.vector_store %arg4[%c0_13, %c0_14, %c0_15, %c0_16], %19 {strides = array<i32>} : memref<1x1x4x1xf32, #tpu.memory_space<vmem>>, vector<1x1x4x1xf32>,
    } else {
    }
    return
  }
  func.func @transform_0(%arg0: i32, %arg1: i32, %arg2: i32) -> (i32, i32, i32) {
    %c1_i32 = arith.constant 1 : i32
    %0 = arith.muli %arg1, %c1_i32 : i32
    %1 = arith.addi %0, %arg2 : i32
    %c0_i32 = arith.constant 0 : i32
    %c0_i32_0 = arith.constant 0 : i32
    return %arg0, %c0_i32, %1 : i32, i32, i32
  }
  func.func @transform_1(%arg0: i32, %arg1: i32, %arg2: i32) -> (i32, i32, i32, i32) {
    %c0_i32 = arith.constant 0 : i32
    %c0_i32_0 = arith.constant 0 : i32
    %c0_i32_1 = arith.constant 0 : i32
    return %arg0, %arg1, %c0_i32, %c0_i32_0 : i32, i32, i32, i32
  }
}

module attributes {stable_mosaic.version = 11 : i64} {
  func.func @gemm_kernel(%arg0: i32, %arg1: i32, %arg2: memref<1x1x4xf32, #tpu.memory_space<vmem>>, %arg3: memref<2x4xf32, #tpu.memory_space<vmem>>, %arg4: memref<2x1xf32, #tpu.memory_space<vmem>>, %arg5: memref<1x4x256xf32, #tpu.memory_space<vmem>>, %arg6: memref<1x2x256xf32, #tpu.memory_space<vmem>>) attributes {dimension_semantics = [#tpu.dimension_semantics<parallel>, #tpu.dimension_semantics<parallel>], iteration_bounds = array<i64: 2, 1>, scalar_prefetch = 0 : i64, scratch_operands = 0 : i64, tpu.core_type = #tpu.core_type<tc>, window_params = [{transform_indices = @transform_0, window_bounds = array<i64: 1, 1, 4>}, {pipeline_mode = #tpu.pipeline_mode<synchronous>, transform_indices = @transform_1, window_bounds = array<i64: 2, 4>}, {pipeline_mode = #tpu.pipeline_mode<synchronous>, transform_indices = @transform_2, window_bounds = array<i64: 2, 1>}, {transform_indices = @transform_3, window_bounds = array<i64: 1, 4, 256>}, {transform_indices = @transform_4, window_bounds = array<i64: 1, 2, 256>}]} {
    %c0 = arith.constant 0 : index
    %c0_0 = arith.constant 0 : index
    %0 = vector.load %arg3[%c0, %c0_0] : memref<2x4xf32, #tpu.memory_space<vmem>>, vector<2x4xf32>
    %c0_1 = arith.constant 0 : index
    %c0_2 = arith.constant 0 : index
    %c0_3 = arith.constant 0 : index
    %1 = vector.load %arg2[%c0_1, %c0_2, %c0_3] : memref<1x1x4xf32, #tpu.memory_space<vmem>>, vector<1x1x4xf32>
    %2 = vector.shape_cast %1 : vector<1x1x4xf32> to vector<1x4xf32>
    %3 = vector.broadcast %2 : vector<1x4xf32> to vector<2x4xf32>
    %4 = arith.mulf %0, %3 : vector<2x4xf32>
    %c0_4 = arith.constant 0 : index
    %c0_5 = arith.constant 0 : index
    %c0_6 = arith.constant 0 : index
    %5 = vector.load %arg5[%c0_4, %c0_5, %c0_6] : memref<1x4x256xf32, #tpu.memory_space<vmem>>, vector<1x4x256xf32>
    %6 = vector.shape_cast %5 : vector<1x4x256xf32> to vector<4x256xf32>
    %cst = arith.constant dense<0.000000e+00> : vector<2x256xf32>
    %7 = tpu.matmul %4, %6, %cst {dimension_numbers = #tpu.dot_dimension_numbers<[1], [0], [0], [1], [0, 0, 1, 1], [], []>} : vector<2x4xf32>, vector<4x256xf32>, vector<2x256xf32> -> vector<2x256xf32>
    %c0_7 = arith.constant 0 : index
    %c0_8 = arith.constant 0 : index
    %8 = vector.load %arg4[%c0_7, %c0_8] : memref<2x1xf32, #tpu.memory_space<vmem>>, vector<2x1xf32>
    %9 = vector.broadcast %8 : vector<2x1xf32> to vector<2x256xf32>
    %10 = arith.addf %7, %9 : vector<2x256xf32>
    %c0_9 = arith.constant 0 : index
    %c0_10 = arith.constant 0 : index
    %c0_11 = arith.constant 0 : index
    %11 = vector.load %arg6[%c0_9, %c0_10, %c0_11] : memref<1x2x256xf32, #tpu.memory_space<vmem>>, vector<1x2x256xf32>
    %12 = vector.shape_cast %11 : vector<1x2x256xf32> to vector<2x256xf32>
    %13 = vector.shape_cast %10 : vector<2x256xf32> to vector<1x2x256xf32>
    tpu.vector_store %arg6[%c0_9, %c0_10, %c0_11], %13 {strides = array<i32>} : memref<1x2x256xf32, #tpu.memory_space<vmem>>, vector<1x2x256xf32>,
    return
  }
  func.func @transform_0(%arg0: i32, %arg1: i32) -> (i32, i32, i32) {
    %c0_i32 = arith.constant 0 : i32
    %c0_i32_0 = arith.constant 0 : i32
    %c0_i32_1 = arith.constant 0 : i32
    return %arg0, %c0_i32, %c0_i32_0 : i32, i32, i32
  }
  func.func @transform_1(%arg0: i32, %arg1: i32) -> (i32, i32) {
    %c0_i32 = arith.constant 0 : i32
    %c0_i32_0 = arith.constant 0 : i32
    %c0_i32_1 = arith.constant 0 : i32
    return %c0_i32, %c0_i32_0 : i32, i32
  }
  func.func @transform_2(%arg0: i32, %arg1: i32) -> (i32, i32) {
    %c0_i32 = arith.constant 0 : i32
    %c0_i32_0 = arith.constant 0 : i32
    %c0_i32_1 = arith.constant 0 : i32
    return %c0_i32, %c0_i32_0 : i32, i32
  }
  func.func @transform_3(%arg0: i32, %arg1: i32) -> (i32, i32, i32) {
    %c0_i32 = arith.constant 0 : i32
    %c0_i32_0 = arith.constant 0 : i32
    return %arg0, %c0_i32, %arg1 : i32, i32, i32
  }
  func.func @transform_4(%arg0: i32, %arg1: i32) -> (i32, i32, i32) {
    %c0_i32 = arith.constant 0 : i32
    %c0_i32_0 = arith.constant 0 : i32
    return %arg0, %c0_i32, %arg1 : i32, i32, i32
  }
}

</mosaic_0001>

<llo_original>
// kernel: eca_forward.2
$region0: #{eca_forward.2}
  #allocation0 [shape = 'u32[]', space=smem, size = 0x4, offset = 0x4, fixed_abs, tag = 'smem constant byte address 0x4 - core index']
  #allocation1 [shape = 'u32[144,128]{1,0:T(1,128)}', space=vmem, size = 0x12000, scoped, tag = 'internal scratch']
  #allocation2 [shape = 'f32[4,128]{1,0:T(4,128)}', space=vmem, size = 0x800, scoped, tag = 'scratch operand']
  %s0 = inlined_call_operand.hbm [shape: f32[2,4,256], index: 0, kind: input, shape index: {}]
  %s1 = inlined_call_operand.hbm [shape: f32[2,1,4,1], index: 1, kind: output, shape index: {}]
  %s2 = sld [smem:[#allocation0]]
  $region49: #{eca_forward.2} parent=0
    _
  %s4 = ssub.s32 1, %s2
  %s5 = scalar_select 0, %s4, %s2
  $region1: #{eca_forward.2} parent=0
    #allocation3 [shape = 'u8[8192]{0}', space=vmem, size = 0x2000, scoped, tag = 'input window, operand 0']
    #allocation4 [shape = 's32[2]{0}', space=sflag, size = 0x8, scoped, tag = 'scoped memory for eca_forward.2']
    #allocation5 [shape = 's32[2]{0}', space=sflag, size = 0x8, scoped, tag = 'scoped memory for eca_forward.2']
    #allocation6 [shape = 'u8[4096]{0}', space=vmem, size = 0x1000, scoped, tag = 'output window, operand 0']
    %6 = vsyncpa [#allocation4], 0
    %s7 = scalar_lea.sflag [#allocation4], 1
    %8 = vsyncpa %s7, 0
    %9 = vsyncpa [#allocation5], 0
    %s10 = scalar_lea.sflag [#allocation5], 1
    %11 = vsyncpa %s10, 0
    loop: start=0, step=1, limit=4
    $region2: #{eca_forward.2} parent=1 // loop_pre_header
      _
    $region3: #{eca_forward.2} parent=1 // loop_header
      %s13 = sphi 0, %s17
      %p14 = scmp.ge.s32.totalorder %s13, 4
      %s20 = sphi 0, %s39
      %s21 = sphi 0, %s35
      %s22 = sphi 0, %s31
      %s23 = sphi 0, %s20
      %s24 = sphi 0, %s21
      %s25 = sphi 0, %s22
      %s26 = sphi 0, %s23
      %s27 = sphi 0, %s24
      %s28 = sphi 0, %s25
      %s46 = sphi 0, %s48
      %s49 = sphi 0, %s46
      %s50 = sphi 0, %s49
      %s66 = sphi 0, %s50
      %s74 = sphi 0, %s76
      %s77 = sphi 0, %s74
      %s78 = sphi 0, %s77
      %s94 = sphi 0, %s78
    $region4: #{eca_forward.2} parent=1 // loop_header_branch
      %16 = sbr.rel (%p14) target = $region8
    $region5: #{eca_forward.2} parent=1 // loop_body
      %s18 = ssub.s32 %s13, 1
      %s19 = ssub.s32 %s13, 2
      %s29 = sadd.s32 1, %s22
      %p30 = scmp.ge.s32.totalorder %s29, 1
      %s31 = scalar_select %p30, 0, %s29
      %s32 = sadd.s32 1, %s21
      %s33 = scalar_select %p30, %s32, %s21
      %p34 = scmp.ge.s32.totalorder %s33, 1
      %s35 = scalar_select %p34, 0, %s33
      %s36 = sadd.s32 1, %s20
      %s37 = scalar_select %p34, %s36, %s20
      %p38 = scmp.ge.s32.totalorder %s37, 2
      %s39 = scalar_select %p38, 0, %s37
      %s40 = sadd.s32 %s21, %s22
      %s41 = sadd.s32 %s35, %s31
      %s42 = ssub.s32 %s20, %s39
      %s43 = ssub.s32 %s40, %s41
      %s44 = sor.u32 %s42, %s43
      %p45 = scmp.eq.s32.totalorder %s44, 0
      %s47 = sadd.s32 %s46, 1
      %s48 = scalar_select %p45, %s46, %s47
      %p51 = pneg %p45
      %p52 = scmp.eq.s32.totalorder %s13, 1
      %p53 = por %p51, %p52
      %p54 = scmp.ne.s32.totalorder %s46, %s49
      %p55 = scmp.eq.s32.totalorder %s13, 0
      %p56 = por %p54, %p55
      %p57 = scmp.ne.s32.totalorder %s46, %s49
      %p58 = scmp.eq.s32.totalorder %s18, 1
      %p59 = por %p57, %p58
      %p60 = scmp.ne.s32.totalorder %s49, %s50
      %p61 = scmp.eq.s32.totalorder %s18, 0
      %p62 = por %p60, %p61
      %p63 = scmp.ne.s32.totalorder %s49, %s50
      %p64 = scmp.eq.s32.totalorder %s19, 1
      %p65 = por %p63, %p64
      %p67 = scmp.ne.s32.totalorder %s50, %s66
      %p68 = scmp.eq.s32.totalorder %s19, 0
      %p69 = por %p67, %p68
      %s70 = ssub.s32 %s20, %s39
      %s71 = ssub.s32 %s21, %s35
      %s72 = sor.u32 %s70, %s71
      %p73 = scmp.eq.s32.totalorder %s72, 0
      %s75 = sadd.s32 %s74, 1
      %s76 = scalar_select %p73, %s74, %s75
      %p79 = pneg %p73
      %p80 = scmp.eq.s32.totalorder %s13, 1
      %p81 = por %p79, %p80
      %p82 = scmp.ne.s32.totalorder %s74, %s77
      %p83 = scmp.eq.s32.totalorder %s13, 0
      %p84 = por %p82, %p83
      %p85 = scmp.ne.s32.totalorder %s74, %s77
      %p86 = scmp.eq.s32.totalorder %s18, 1
      %p87 = por %p85, %p86
      %p88 = scmp.ne.s32.totalorder %s77, %s78
      %p89 = scmp.eq.s32.totalorder %s18, 0
      %p90 = por %p88, %p89
      %p91 = scmp.ne.s32.totalorder %s77, %s78
      %p92 = scmp.eq.s32.totalorder %s19, 1
      %p93 = por %p91, %p92
      %p95 = scmp.ne.s32.totalorder %s78, %s94
      %p96 = scmp.eq.s32.totalorder %s19, 0
      %p97 = por %p95, %p96
      %p98 = scmp.le.s32.totalorder 1, %s13
      %p99 = scmp.lt.s32.totalorder %s13, 3
      %p100 = pnand %p98, %p99
      %p101 = pneg %p100
      // Predicated region
      $region9: #{eca_forward.2} parent=5 // pred_check
        _
      $region10: #{eca_forward.2} parent=5 // pred_check_branch
        %103 = sbr.rel (%p100) target = $region12
      $region11: #{eca_forward.2} parent=5 // pred_region
        %s104 = ssub.s32 %s13, 1
      $region12: #{eca_forward.2} parent=5 // pred_fallthru
        _
      %p105 = scmp.lt.s32.totalorder %s13, 2
      // Predicated region
      $region13: #{eca_forward.2} parent=5 // pred_check
        %p106 = pneg %p105
      $region14: #{eca_forward.2} parent=5 // pred_check_branch
        %108 = sbr.rel (%p106) target = $region16
      $region15: #{eca_forward.2} parent=5 // pred_region
        // Predicated region
        $region17: #{eca_forward.2} parent=15 // pred_check
          %p109 = pneg %p56
        $region18: #{eca_forward.2} parent=15 // pred_check_branch
          %111 = sbr.rel (%p109) target = $region20
        $region19: #{eca_forward.2} parent=15 // pred_region
          %s112 = sand.u32 %s46, 1
          %s113 = scalar_lea.sflag [#allocation4], %s112
          %s114 = sand.u32 %s46, 1
          %s115 = smul.addr %s114, 8
          %s116 = scalar_lea.vmem [#allocation3], %s115
          %s117 = sadd.s32 %s21, %s22
          %s118 = smul.u32 2, %s117
          %s120 = ssub.s32 128, 128
          %121 = vsyncadd %s113, %s120
          %s122 = smul.addr %s20, 2
          %s123 = sadd.s32 %s118, %s122
          %s124 = smul.addr %s123, 64
          %s125 = scalar_lea.hbm %s0, %s124
          %s127 = sshll.u32 %s116, 4
          %s128 = int_to_ptr.vmem [resolvable:$true] %s127
          %130 = dma.hbm_to_vmem [thread:$0]  %s125, 128, %s128, %s113
        $region20: #{eca_forward.2} parent=15 // pred_fallthru
          _
      $region16: #{eca_forward.2} parent=5 // pred_fallthru
        _
      %p131 = scmp.le.s32.totalorder 1, %s13
      %p132 = scmp.lt.s32.totalorder %s13, 3
      %p133 = pnand %p131, %p132
      %p134 = pneg %p133
      // Predicated region
      $region21: #{eca_forward.2} parent=5 // pred_check
        _
      $region22: #{eca_forward.2} parent=5 // pred_check_branch
        %136 = sbr.rel (%p133) target = $region24
      $region23: #{eca_forward.2} parent=5 // pred_region
        %s137 = ssub.s32 %s13, 1
        %s138 = sand.u32 %s49, 1
        %s139 = scalar_lea.sflag [#allocation4], %s138
        %s140 = sand.u32 %s49, 1
        %s141 = smul.addr %s140, 8
        %s142 = scalar_lea.vmem [#allocation3], %s141
        // Predicated region
        $region25: #{eca_forward.2} parent=23 // pred_check
          %p143 = pneg %p62
        $region26: #{eca_forward.2} parent=23 // pred_check_branch
          %145 = sbr.rel (%p143) target = $region28
        $region27: #{eca_forward.2} parent=23 // pred_region
          %146 = dma.done %s139, 128
        $region28: #{eca_forward.2} parent=23 // pred_fallthru
          _
        %s147 = sand.u32 %s49, 1
        %s148 = scalar_lea.sflag [#allocation4], %s147
        %s149 = sand.u32 %s49, 1
        %s150 = smul.addr %s149, 8
        %s151 = scalar_lea.vmem [#allocation3], %s150
        %p152 = pneg %p62
        %p153 = pneg %p59
        %p154 = pneg %p90
        %p155 = pneg %p87
        %s156 = sand.u32 %s77, 1
        %s157 = scalar_lea.sflag [#allocation5], %s156
        %s158 = sand.u32 %s77, 1
        %s159 = smul.addr %s158, 4
        %s160 = scalar_lea.vmem [#allocation6], %s159
        %s161 = sadd.s32 %s24, %s25
        %s162 = smul.u32 2, %s161
        %p163 = scmp.eq.s32.totalorder %s25, 0
        // Predicated region
        $region29: #{eca_forward.2} parent=23 // pred_check
          %p164 = pneg %p163
        $region30: #{eca_forward.2} parent=23 // pred_check_branch
          %166 = sbr.rel (%p164) target = $region32
        $region31: #{eca_forward.2} parent=23 // pred_region
          %167 = vst [vmem:[#allocation2] sm:$0xf] 0.0
        $region32: #{eca_forward.2} parent=23 // pred_fallthru
          _
        %v168 = vld [vmem:[#allocation2] sm:$0xf]
        %v169 = vld [vmem:[%s142] sm:$0xf]
        %v170 = vadd.f32 %v168, %v169
        %v171 = vld [vmem:[%s142 + $0x4] sm:$0xf]
        %v172 = vadd.f32 %v170, %v171
        %173 = vst [vmem:[#allocation2] sm:$0xf] %v172
        // Predicated region
        $region33: #{eca_forward.2} parent=23 // pred_check
          %p174 = pneg %p163
        $region34: #{eca_forward.2} parent=23 // pred_check_branch
          %176 = sbr.rel (%p174) target = $region36
        $region35: #{eca_forward.2} parent=23 // pred_region
          %v177 = vld [vmem:[#allocation2] sm:$0xf]
          %vm178 = vcmask 1043456
          %v179 = vsel %vm178, %v177, 0.0
          %180 = vadd.xlane.f32.xlu0 %v179
          %v181 = vpop.xlane.xlu0 %180
          %vm182 = vcmask 3072
          %183 = vst.msk [vmem:[%s160] sm:$0xf] %vm182, %v181
        $region36: #{eca_forward.2} parent=23 // pred_fallthru
          _
        %s184 = sand.u32 %s77, 1
        %s185 = scalar_lea.sflag [#allocation5], %s184
        %s186 = sand.u32 %s77, 1
        %s187 = smul.addr %s186, 4
        %s188 = scalar_lea.vmem [#allocation6], %s187
        // Predicated region
        $region37: #{eca_forward.2} parent=23 // pred_check
          %p189 = pneg %p87
        $region38: #{eca_forward.2} parent=23 // pred_check_branch
          %191 = sbr.rel (%p189) target = $region40
        $region39: #{eca_forward.2} parent=23 // pred_region
          %s193 = ssub.s32 64, 64
          %194 = vsyncadd %s185, %s193
          %s195 = sadd.s32 %s24, %s23
          %s196 = smul.addr %s195, 64
          %s197 = scalar_lea.hbm %s1, %s196
          %s199 = sshll.u32 %s188, 4
          %s200 = int_to_ptr.vmem [resolvable:$true] %s199
          %202 = dma.vmem_to_hbm [thread:$0]  %s200, 64, %s197, %s185
        $region40: #{eca_forward.2} parent=23 // pred_fallthru
          _
      $region24: #{eca_forward.2} parent=5 // pred_fallthru
        _
      %p203 = scmp.le.s32.totalorder 2, %s13
      // Predicated region
      $region41: #{eca_forward.2} parent=5 // pred_check
        %p204 = pneg %p203
      $region42: #{eca_forward.2} parent=5 // pred_check_branch
        %206 = sbr.rel (%p204) target = $region44
      $region43: #{eca_forward.2} parent=5 // pred_region
        %s207 = ssub.s32 %s13, 2
        // Predicated region
        $region45: #{eca_forward.2} parent=43 // pred_check
          %p208 = pneg %p93
        $region46: #{eca_forward.2} parent=43 // pred_check_branch
          %210 = sbr.rel (%p208) target = $region48
        $region47: #{eca_forward.2} parent=43 // pred_region
          %s211 = sand.u32 %s78, 1
          %s212 = scalar_lea.sflag [#allocation5], %s211
          %s213 = sand.u32 %s78, 1
          %s214 = smul.addr %s213, 4
          %s215 = scalar_lea.vmem [#allocation6], %s214
          %216 = dma.done %s212, 64
        $region48: #{eca_forward.2} parent=43 // pred_fallthru
          _
      $region44: #{eca_forward.2} parent=5 // pred_fallthru
        _
    $region6: #{eca_forward.2} parent=1 // loop_footer
      %s17 = sadd.s32 1, %s13
    $region7: #{eca_forward.2} parent=1 // loop_footer_branch
      %12 = sbr.rel target = $region3
    $region8: #{eca_forward.2} parent=1 // loop_exit
      _
    %217 = vsyncpa [#allocation4], 1
    %s218 = scalar_lea.sflag [#allocation4], 1
    %219 = vsyncpa %s218, 1
    %220 = vsyncpa [#allocation5], 1
    %s221 = scalar_lea.sflag [#allocation5], 1
    %222 = vsyncpa %s221, 1

// kernel: eca_forward.3
$region0: #{eca_forward.3}
  #allocation0 [shape = 'u32[]', space=smem, size = 0x4, offset = 0x4, fixed_abs, tag = 'smem constant byte address 0x4 - core index']
  #allocation1 [shape = 'u32[144,128]{1,0:T(1,128)}', space=vmem, size = 0x12000, scoped, tag = 'internal scratch']
  %s0 = inlined_call_operand.hbm [shape: f32[2,1,4], index: 0, kind: input, shape index: {}]
  %s1 = inlined_call_operand.hbm [shape: f32[2,4], index: 1, kind: input, shape index: {}]
  %s2 = inlined_call_operand.hbm [shape: f32[2,1], index: 2, kind: input, shape index: {}]
  %s3 = inlined_call_operand.hbm [shape: f32[2,4,256], index: 3, kind: input, shape index: {}]
  %s4 = inlined_call_operand.hbm [shape: f32[2,2,256], index: 4, kind: output, shape index: {}]
  %s5 = sld [smem:[#allocation0]]
  $region65: #{eca_forward.3} parent=0
    _
  %s7 = ssub.s32 1, %s5
  %s8 = scalar_select 0, %s7, %s5
  $region1: #{eca_forward.3} parent=0
    #allocation2 [shape = 'u8[1024]{0}', space=vmem, size = 0x400, scoped, tag = 'input window, operand 0']
    #allocation3 [shape = 's32[2]{0}', space=sflag, size = 0x8, scoped, tag = 'scoped memory for eca_forward.3']
    #allocation4 [shape = 's32[2]{0}', space=sflag, size = 0x8, scoped, tag = 'scoped memory for eca_forward.3']
    #allocation5 [shape = 'u8[1024]{0}', space=vmem, size = 0x400, scoped, tag = 'input window, operand 1, single buffered']
    #allocation6 [shape = 's32[1]{0}', space=sflag, size = 0x4, scoped, tag = 'scoped memory for eca_forward.3']
    #allocation7 [shape = 'u8[1024]{0}', space=vmem, size = 0x400, scoped, tag = 'input window, operand 2, single buffered']
    #allocation8 [shape = 'u8[8192]{0}', space=vmem, size = 0x2000, scoped, tag = 'input window, operand 3']
    #allocation9 [shape = 's32[2]{0}', space=sflag, size = 0x8, scoped, tag = 'scoped memory for eca_forward.3']
    #allocation10 [shape = 'u8[4096]{0}', space=vmem, size = 0x1000, scoped, tag = 'output window, operand 0']
    %9 = vsyncpa [#allocation3], 0
    %s10 = scalar_lea.sflag [#allocation3], 1
    %11 = vsyncpa %s10, 0
    %12 = vsyncpa [#allocation6], 0
    %13 = vsyncpa [#allocation9], 0
    %s14 = scalar_lea.sflag [#allocation9], 1
    %15 = vsyncpa %s14, 0
    %16 = vsyncpa [#allocation4], 0
    %s17 = scalar_lea.sflag [#allocation4], 1
    %18 = vsyncpa %s17, 0
    loop: start=0, step=1, limit=4
    $region2: #{eca_forward.3} parent=1 // loop_pre_header
      _
    $region3: #{eca_forward.3} parent=1 // loop_header
      %s20 = sphi 0, %s24
      %p21 = scmp.ge.s32.totalorder %s20, 4
      %s27 = sphi 0, %s39
      %s28 = sphi 0, %s35
      %s29 = sphi 0, %s27
      %s30 = sphi 0, %s28
      %s31 = sphi 0, %s29
      %s32 = sphi 0, %s30
      %s42 = sphi 0, %s44
      %s45 = sphi 0, %s42
      %s46 = sphi 0, %s45
      %s62 = sphi 0, %s46
      %s66 = sphi 0, %s66
      %s68 = sphi 0, %s66
      %s69 = sphi 0, %s68
      %s83 = sphi 0, %s69
      %s87 = sphi 0, %s87
      %s89 = sphi 0, %s87
      %s90 = sphi 0, %s89
      %s104 = sphi 0, %s90
      %s112 = sphi 0, %s114
      %s115 = sphi 0, %s112
      %s116 = sphi 0, %s115
      %s132 = sphi 0, %s116
      %s140 = sphi 0, %s142
      %s143 = sphi 0, %s140
      %s144 = sphi 0, %s143
      %s160 = sphi 0, %s144
    $region4: #{eca_forward.3} parent=1 // loop_header_branch
      %23 = sbr.rel (%p21) target = $region8
    $region5: #{eca_forward.3} parent=1 // loop_body
      %s25 = ssub.s32 %s20, 1
      %s26 = ssub.s32 %s20, 2
      %s33 = sadd.s32 1, %s28
      %p34 = scmp.ge.s32.totalorder %s33, 1
      %s35 = scalar_select %p34, 0, %s33
      %s36 = sadd.s32 1, %s27
      %s37 = scalar_select %p34, %s36, %s27
      %p38 = scmp.ge.s32.totalorder %s37, 2
      %s39 = scalar_select %p38, 0, %s37
      %s40 = ssub.s32 %s27, %s39
      %p41 = scmp.eq.s32.totalorder %s40, 0
      %s43 = sadd.s32 %s42, 1
      %s44 = scalar_select %p41, %s42, %s43
      %p47 = pneg %p41
      %p48 = scmp.eq.s32.totalorder %s20, 1
      %p49 = por %p47, %p48
      %p50 = scmp.ne.s32.totalorder %s42, %s45
      %p51 = scmp.eq.s32.totalorder %s20, 0
      %p52 = por %p50, %p51
      %p53 = scmp.ne.s32.totalorder %s42, %s45
      %p54 = scmp.eq.s32.totalorder %s25, 1
      %p55 = por %p53, %p54
      %p56 = scmp.ne.s32.totalorder %s45, %s46
      %p57 = scmp.eq.s32.totalorder %s25, 0
      %p58 = por %p56, %p57
      %p59 = scmp.ne.s32.totalorder %s45, %s46
      %p60 = scmp.eq.s32.totalorder %s26, 1
      %p61 = por %p59, %p60
      %p63 = scmp.ne.s32.totalorder %s46, %s62
      %p64 = scmp.eq.s32.totalorder %s26, 0
      %p65 = por %p63, %p64
      %s67 = sadd.s32 %s66, 1
      %p70 = scmp.eq.s32.totalorder %s20, 1
      %p71 = scmp.ne.s32.totalorder %s66, %s68
      %p72 = scmp.eq.s32.totalorder %s20, 0
      %p73 = por %p71, %p72
      %p74 = scmp.ne.s32.totalorder %s66, %s68
      %p75 = scmp.eq.s32.totalorder %s25, 1
      %p76 = por %p74, %p75
      %p77 = scmp.ne.s32.totalorder %s68, %s69
      %p78 = scmp.eq.s32.totalorder %s25, 0
      %p79 = por %p77, %p78
      %p80 = scmp.ne.s32.totalorder %s68, %s69
      %p81 = scmp.eq.s32.totalorder %s26, 1
      %p82 = por %p80, %p81
      %p84 = scmp.ne.s32.totalorder %s69, %s83
      %p85 = scmp.eq.s32.totalorder %s26, 0
      %p86 = por %p84, %p85
      %s88 = sadd.s32 %s87, 1
      %p91 = scmp.eq.s32.totalorder %s20, 1
      %p92 = scmp.ne.s32.totalorder %s87, %s89
      %p93 = scmp.eq.s32.totalorder %s20, 0
      %p94 = por %p92, %p93
      %p95 = scmp.ne.s32.totalorder %s87, %s89
      %p96 = scmp.eq.s32.totalorder %s25, 1
      %p97 = por %p95, %p96
      %p98 = scmp.ne.s32.totalorder %s89, %s90
      %p99 = scmp.eq.s32.totalorder %s25, 0
      %p100 = por %p98, %p99
      %p101 = scmp.ne.s32.totalorder %s89, %s90
      %p102 = scmp.eq.s32.totalorder %s26, 1
      %p103 = por %p101, %p102
      %p105 = scmp.ne.s32.totalorder %s90, %s104
      %p106 = scmp.eq.s32.totalorder %s26, 0
      %p107 = por %p105, %p106
      %s108 = ssub.s32 %s27, %s39
      %s109 = ssub.s32 %s28, %s35
      %s110 = sor.u32 %s108, %s109
      %p111 = scmp.eq.s32.totalorder %s110, 0
      %s113 = sadd.s32 %s112, 1
      %s114 = scalar_select %p111, %s112, %s113
      %p117 = pneg %p111
      %p118 = scmp.eq.s32.totalorder %s20, 1
      %p119 = por %p117, %p118
      %p120 = scmp.ne.s32.totalorder %s112, %s115
      %p121 = scmp.eq.s32.totalorder %s20, 0
      %p122 = por %p120, %p121
      %p123 = scmp.ne.s32.totalorder %s112, %s115
      %p124 = scmp.eq.s32.totalorder %s25, 1
      %p125 = por %p123, %p124
      %p126 = scmp.ne.s32.totalorder %s115, %s116
      %p127 = scmp.eq.s32.totalorder %s25, 0
      %p128 = por %p126, %p127
      %p129 = scmp.ne.s32.totalorder %s115, %s116
      %p130 = scmp.eq.s32.totalorder %s26, 1
      %p131 = por %p129, %p130
      %p133 = scmp.ne.s32.totalorder %s116, %s132
      %p134 = scmp.eq.s32.totalorder %s26, 0
      %p135 = por %p133, %p134
      %s136 = ssub.s32 %s27, %s39
      %s137 = ssub.s32 %s28, %s35
      %s138 = sor.u32 %s136, %s137
      %p139 = scmp.eq.s32.totalorder %s138, 0
      %s141 = sadd.s32 %s140, 1
      %s142 = scalar_select %p139, %s140, %s141
      %p145 = pneg %p139
      %p146 = scmp.eq.s32.totalorder %s20, 1
      %p147 = por %p145, %p146
      %p148 = scmp.ne.s32.totalorder %s140, %s143
      %p149 = scmp.eq.s32.totalorder %s20, 0
      %p150 = por %p148, %p149
      %p151 = scmp.ne.s32.totalorder %s140, %s143
      %p152 = scmp.eq.s32.totalorder %s25, 1
      %p153 = por %p151, %p152
      %p154 = scmp.ne.s32.totalorder %s143, %s144
      %p155 = scmp.eq.s32.totalorder %s25, 0
      %p156 = por %p154, %p155
      %p157 = scmp.ne.s32.totalorder %s143, %s144
      %p158 = scmp.eq.s32.totalorder %s26, 1
      %p159 = por %p157, %p158
      %p161 = scmp.ne.s32.totalorder %s144, %s160
      %p162 = scmp.eq.s32.totalorder %s26, 0
      %p163 = por %p161, %p162
      %p164 = scmp.le.s32.totalorder 1, %s20
      %p165 = scmp.lt.s32.totalorder %s20, 3
      %p166 = pnand %p164, %p165
      %p167 = pneg %p166
      // Predicated region
      $region9: #{eca_forward.3} parent=5 // pred_check
        _
      $region10: #{eca_forward.3} parent=5 // pred_check_branch
        %169 = sbr.rel (%p166) target = $region12
      $region11: #{eca_forward.3} parent=5 // pred_region
        %s170 = ssub.s32 %s20, 1
        // Predicated region
        $region13: #{eca_forward.3} parent=11 // pred_check
          %p171 = pneg %p79
        $region14: #{eca_forward.3} parent=11 // pred_check_branch
          %173 = sbr.rel (%p171) target = $region16
        $region15: #{eca_forward.3} parent=11 // pred_region
          %s175 = ssub.s32 32, 32
          %176 = vsyncadd [#allocation6], %s175
          %s178 = sshll.u32 [#allocation5], 4
          %s179 = int_to_ptr.vmem [resolvable:$true] %s178
          %181 = dma.hbm_to_vmem [thread:$0]  %s1, 32, %s179, [#allocation6]
        $region16: #{eca_forward.3} parent=11 // pred_fallthru
          _
        // Predicated region
        $region17: #{eca_forward.3} parent=11 // pred_check
          %p182 = pneg %p100
        $region18: #{eca_forward.3} parent=11 // pred_check_branch
          %184 = sbr.rel (%p182) target = $region20
        $region19: #{eca_forward.3} parent=11 // pred_region
          %s186 = ssub.s32 32, 32
          %187 = vsyncadd [#allocation6], %s186
          %s189 = sshll.u32 [#allocation7], 4
          %s190 = int_to_ptr.vmem [resolvable:$true] %s189
          %192 = dma.hbm_to_vmem [thread:$0]  %s2, 32, %s190, [#allocation6]
        $region20: #{eca_forward.3} parent=11 // pred_fallthru
          _
      $region12: #{eca_forward.3} parent=5 // pred_fallthru
        _
      %p193 = scmp.lt.s32.totalorder %s20, 2
      // Predicated region
      $region21: #{eca_forward.3} parent=5 // pred_check
        %p194 = pneg %p193
      $region22: #{eca_forward.3} parent=5 // pred_check_branch
        %196 = sbr.rel (%p194) target = $region24
      $region23: #{eca_forward.3} parent=5 // pred_region
        // Predicated region
        $region25: #{eca_forward.3} parent=23 // pred_check
          %p197 = pneg %p52
        $region26: #{eca_forward.3} parent=23 // pred_check_branch
          %199 = sbr.rel (%p197) target = $region28
        $region27: #{eca_forward.3} parent=23 // pred_region
          %s200 = sand.u32 %s42, 1
          %s201 = scalar_lea.sflag [#allocation3], %s200
          %s202 = sand.u32 %s42, 1
          %s203 = scalar_lea.vmem [#allocation2], %s202
          %s205 = ssub.s32 16, 16
          %206 = vsyncadd %s201, %s205
          %s207 = smul.addr %s27, 16
          %s208 = scalar_lea.hbm %s0, %s207
          %s210 = sshll.u32 %s203, 4
          %s211 = int_to_ptr.vmem [resolvable:$true] %s210
          %213 = dma.hbm_to_vmem [thread:$0]  %s208, 16, %s211, %s201
        $region28: #{eca_forward.3} parent=23 // pred_fallthru
          _
        // Predicated region
        $region29: #{eca_forward.3} parent=23 // pred_check
          %p214 = pneg %p122
        $region30: #{eca_forward.3} parent=23 // pred_check_branch
          %216 = sbr.rel (%p214) target = $region32
        $region31: #{eca_forward.3} parent=23 // pred_region
          %s217 = sand.u32 %s112, 1
          %s218 = scalar_lea.sflag [#allocation9], %s217
          %s219 = sand.u32 %s112, 1
          %s220 = smul.addr %s219, 8
          %s221 = scalar_lea.vmem [#allocation8], %s220
          %s222 = smul.u32 2, %s28
          %s224 = ssub.s32 128, 128
          %225 = vsyncadd %s218, %s224
          %s226 = smul.addr %s27, 2
          %s227 = sadd.s32 %s222, %s226
          %s228 = smul.addr %s227, 64
          %s229 = scalar_lea.hbm %s3, %s228
          %s231 = sshll.u32 %s221, 4
          %s232 = int_to_ptr.vmem [resolvable:$true] %s231
          %234 = dma.hbm_to_vmem [thread:$0]  %s229, 128, %s232, %s218
        $region32: #{eca_forward.3} parent=23 // pred_fallthru
          _
      $region24: #{eca_forward.3} parent=5 // pred_fallthru
        _
      %p235 = scmp.le.s32.totalorder 1, %s20
      %p236 = scmp.lt.s32.totalorder %s20, 3
      %p237 = pnand %p235, %p236
      %p238 = pneg %p237
      // Predicated region
      $region33: #{eca_forward.3} parent=5 // pred_check
        _
      $region34: #{eca_forward.3} parent=5 // pred_check_branch
        %240 = sbr.rel (%p237) target = $region36
      $region35: #{eca_forward.3} parent=5 // pred_region
        %s241 = ssub.s32 %s20, 1
        %s242 = sand.u32 %s45, 1
        %s243 = scalar_lea.sflag [#allocation3], %s242
        %s244 = sand.u32 %s45, 1
        %s245 = scalar_lea.vmem [#allocation2], %s244
        // Predicated region
        $region37: #{eca_forward.3} parent=35 // pred_check
          %p246 = pneg %p58
        $region38: #{eca_forward.3} parent=35 // pred_check_branch
          %248 = sbr.rel (%p246) target = $region40
        $region39: #{eca_forward.3} parent=35 // pred_region
          %249 = dma.done %s243, 16
        $region40: #{eca_forward.3} parent=35 // pred_fallthru
          _
        // Predicated region
        $region41: #{eca_forward.3} parent=35 // pred_check
          %p250 = pneg %p79
        $region42: #{eca_forward.3} parent=35 // pred_check_branch
          %252 = sbr.rel (%p250) target = $region44
        $region43: #{eca_forward.3} parent=35 // pred_region
          %253 = dma.done [#allocation6], 32
        $region44: #{eca_forward.3} parent=35 // pred_fallthru
          _
        // Predicated region
        $region45: #{eca_forward.3} parent=35 // pred_check
          %p254 = pneg %p100
        $region46: #{eca_forward.3} parent=35 // pred_check_branch
          %256 = sbr.rel (%p254) target = $region48
        $region47: #{eca_forward.3} parent=35 // pred_region
          %257 = dma.done [#allocation6], 32
        $region48: #{eca_forward.3} parent=35 // pred_fallthru
          _
        %s258 = sand.u32 %s115, 1
        %s259 = scalar_lea.sflag [#allocation9], %s258
        %s260 = sand.u32 %s115, 1
        %s261 = smul.addr %s260, 8
        %s262 = scalar_lea.vmem [#allocation8], %s261
        // Predicated region
        $region49: #{eca_forward.3} parent=35 // pred_check
          %p263 = pneg %p128
        $region50: #{eca_forward.3} parent=35 // pred_check_branch
          %265 = sbr.rel (%p263) target = $region52
        $region51: #{eca_forward.3} parent=35 // pred_region
          %266 = dma.done %s259, 128
        $region52: #{eca_forward.3} parent=35 // pred_fallthru
          _
        %s267 = sand.u32 %s45, 1
        %s268 = scalar_lea.sflag [#allocation3], %s267
        %s269 = sand.u32 %s45, 1
        %s270 = scalar_lea.vmem [#allocation2], %s269
        %p271 = pneg %p58
        %p272 = pneg %p55
        %p273 = pneg %p79
        %p274 = pneg %p76
        %p275 = pneg %p100
        %p276 = pneg %p97
        %s277 = sand.u32 %s115, 1
        %s278 = scalar_lea.sflag [#allocation9], %s277
        %s279 = sand.u32 %s115, 1
        %s280 = smul.addr %s279, 8
        %s281 = scalar_lea.vmem [#allocation8], %s280
        %p282 = pneg %p128
        %p283 = pneg %p125
        %p284 = pneg %p156
        %p285 = pneg %p153
        %s286 = sand.u32 %s143, 1
        %s287 = scalar_lea.sflag [#allocation4], %s286
        %s288 = sand.u32 %s143, 1
        %s289 = smul.addr %s288, 4
        %s290 = scalar_lea.vmem [#allocation10], %s289
        %s291 = smul.u32 2, %s30
        %s292 = smul.u32 2, %s30
        %v293 = vld [vmem:[#allocation5] sm:$0x3]
        %v294 = vld [vmem:[%s245] sm:$0x1]
        %v296 = vlaneseq
        %v297 = vshrl.u32 %v296, 7
        %v298 = vsub.s32 0, %v297
        %v299 = vrot.slane %v294, %v298
        %v301 = vmul.f32 %v293, %v299
        %v302 = vld [vmem:[%s262] sm:$0xff]
        %v303 = vld [vmem:[#allocation7] sm:$0x3]
        %305 = vset.pattern.permute.xlu0 0
        %306 = vperm.xlu0 %305, %v303
        %v307 = vpop.permute.xlu0 %306
        %v310 = vcombine.high %v302, %v302
        %vm311 = vcmask 31744
        %v313 = vsel %vm311, %v301, 0
        %vm315 = vcmask 1043456
        %v316 = vsel %vm315, %v302, 0
        %v318 = vsel %vm315, %v310, 0
        %320 = vmatprep.subr.mxu0 %v318
        %321 = vmatpush1.msra.mxu0 %v316
        %322 = vmatprep.subr.mxu0 0.0
        %323 = vmatpush1.msra.mxu0 0.0
        %324 = vmatprep.subr.mxu0 0.0
        %325 = vmatpush1.msra.mxu0 0.0
        %326 = vmatprep.subr.mxu0 0.0
        %327 = vmatpush1.msra.mxu0 0.0
        %328 = vmatprep.subr.mxu0 0.0
        %329 = vmatpush1.msra.mxu0 0.0
        %330 = vmatprep.subr.mxu0 0.0
        %331 = vmatpush1.msra.mxu0 0.0
        %332 = vmatprep.subr.mxu0 0.0
        %333 = vmatpush1.msra.mxu0 0.0
        %334 = vmatprep.subr.mxu0 0.0
        %335 = vmatpush1.msra.mxu0 0.0
        %336 = vmatprep.subr.mxu0 0.0
        %337 = vmatpush1.msra.mxu0 0.0
        %338 = vmatprep.subr.mxu0 0.0
        %339 = vmatpush1.msra.mxu0 0.0
        %340 = vmatprep.subr.mxu0 0.0
        %341 = vmatpush1.msra.mxu0 0.0
        %342 = vmatprep.subr.mxu0 0.0
        %343 = vmatpush1.msra.mxu0 0.0
        %344 = vmatprep.subr.mxu0 0.0
        %345 = vmatpush1.msra.mxu0 0.0
        %346 = vmatprep.subr.mxu0 0.0
        %347 = vmatpush1.msra.mxu0 0.0
        %348 = vmatprep.subr.mxu0 0.0
        %349 = vmatpush1.msra.mxu0 0.0
        %350 = vmatprep.subr.mxu0 0.0
        %351 = vmatpush1.msra.mxu0 0.0
        %352 = vmatprep.subr.mxu0 0.0
        %353 = vmatpush1.msra.mxu0 0.0
        %354 = vmatprep.subr.mxu0 0.0
        %355 = vmatpush1.msra.mxu0 0.0
        %356 = vmatprep.subr.mxu0 0.0
        %357 = vmatpush1.msra.mxu0 0.0
        %358 = vmatprep.subr.mxu0 0.0
        %359 = vmatpush1.msra.mxu0 0.0
        %360 = vmatprep.subr.mxu0 0.0
        %361 = vmatpush1.msra.mxu0 0.0
        %362 = vmatprep.subr.mxu0 0.0
        %363 = vmatpush1.msra.mxu0 0.0
        %364 = vmatprep.subr.mxu0 0.0
        %365 = vmatpush1.msra.mxu0 0.0
        %366 = vmatprep.subr.mxu0 0.0
        %367 = vmatpush1.msra.mxu0 0.0
        %368 = vmatprep.subr.mxu0 0.0
        %369 = vmatpush1.msra.mxu0 0.0
        %370 = vmatprep.subr.mxu0 0.0
        %371 = vmatpush1.msra.mxu0 0.0
        %372 = vmatprep.subr.mxu0 0.0
        %373 = vmatpush1.msra.mxu0 0.0
        %374 = vmatprep.subr.mxu0 0.0
        %375 = vmatpush1.msra.mxu0 0.0
        %376 = vmatprep.subr.mxu0 0.0
        %377 = vmatpush1.msra.mxu0 0.0
        %378 = vmatprep.subr.mxu0 0.0
        %379 = vmatpush1.msra.mxu0 0.0
        %380 = vmatprep.subr.mxu0 0.0
        %381 = vmatpush1.msra.mxu0 0.0
        %382 = vmatprep.subr.mxu0 0.0
        %383 = vmatpush1.msra.mxu0 0.0
        %384 = vmatprep.mubr.f32.mxu0 0.0
        %385 = vmatmul.mubr.f32.gmra.mrb[0].mxu0 %v313
        %v386 = vpop.f32.mrb[0].mxu0
        %v387 = vadd.f32 %v307, %v386
        %v388 = vpop.f32.mrb[0].mxu0
        %v389 = vadd.f32 %v307, %v388
        %390 = vdwg.mxu0
        %v393 = vcombine.low %v387, %v389
        %v395 = vunpack.c.l.s4 1983009808
        %v396 = vunpack.c.0.s8 %v395
        %v397 = vlaneseq
        %v398 = vshrl.u32 %v397, 7
        %v399 = vsub.s32 %v396, %v398
        %v400 = vrot.slane %v393, %v399
        %402 = vst [vmem:[%s290] sm:$0xf] %v400
        %s403 = sand.u32 %s143, 1
        %s404 = scalar_lea.sflag [#allocation4], %s403
        %s405 = sand.u32 %s143, 1
        %s406 = smul.addr %s405, 4
        %s407 = scalar_lea.vmem [#allocation10], %s406
        // Predicated region
        $region53: #{eca_forward.3} parent=35 // pred_check
          %p408 = pneg %p153
        $region54: #{eca_forward.3} parent=35 // pred_check_branch
          %410 = sbr.rel (%p408) target = $region56
        $region55: #{eca_forward.3} parent=35 // pred_region
          %s411 = smul.u32 2, %s30
          %s413 = ssub.s32 64, 64
          %414 = vsyncadd %s404, %s413
          %s415 = smul.addr %s29, 2
          %s416 = sadd.s32 %s411, %s415
          %s417 = smul.addr %s416, 32
          %s418 = scalar_lea.hbm %s4, %s417
          %s420 = sshll.u32 %s407, 4
          %s421 = int_to_ptr.vmem [resolvable:$true] %s420
          %423 = dma.vmem_to_hbm [thread:$0]  %s421, 64, %s418, %s404
        $region56: #{eca_forward.3} parent=35 // pred_fallthru
          _
      $region36: #{eca_forward.3} parent=5 // pred_fallthru
        _
      %p424 = scmp.le.s32.totalorder 2, %s20
      // Predicated region
      $region57: #{eca_forward.3} parent=5 // pred_check
        %p425 = pneg %p424
      $region58: #{eca_forward.3} parent=5 // pred_check_branch
        %427 = sbr.rel (%p425) target = $region60
      $region59: #{eca_forward.3} parent=5 // pred_region
        %s428 = ssub.s32 %s20, 2
        // Predicated region
        $region61: #{eca_forward.3} parent=59 // pred_check
          %p429 = pneg %p159
        $region62: #{eca_forward.3} parent=59 // pred_check_branch
          %431 = sbr.rel (%p429) target = $region64
        $region63: #{eca_forward.3} parent=59 // pred_region
          %s432 = sand.u32 %s144, 1
          %s433 = scalar_lea.sflag [#allocation4], %s432
          %s434 = sand.u32 %s144, 1
          %s435 = smul.addr %s434, 4
          %s436 = scalar_lea.vmem [#allocation10], %s435
          %437 = dma.done %s433, 64
        $region64: #{eca_forward.3} parent=59 // pred_fallthru
          _
      $region60: #{eca_forward.3} parent=5 // pred_fallthru
        _
    $region6: #{eca_forward.3} parent=1 // loop_footer
      %s24 = sadd.s32 1, %s20
    $region7: #{eca_forward.3} parent=1 // loop_footer_branch
      %19 = sbr.rel target = $region3
    $region8: #{eca_forward.3} parent=1 // loop_exit
      _
    %438 = vsyncpa [#allocation3], 1
    %s439 = scalar_lea.sflag [#allocation3], 1
    %440 = vsyncpa %s439, 1
    %441 = vsyncpa [#allocation6], 1
    %442 = vsyncpa [#allocation9], 1
    %s443 = scalar_lea.sflag [#allocation9], 1
    %444 = vsyncpa %s443, 1
    %445 = vsyncpa [#allocation4], 1
    %s446 = scalar_lea.sflag [#allocation4], 1
    %447 = vsyncpa %s446, 1

</llo_original>
